<compile_context>
chip_gen: v7x
topology: tpu7x:2x2x1
jax: 0.10.0
libtpu: 0.0.40
codegen_flags: <defaults>
</compile_context>

<pallas_src>
import functools

import jax
import jax.numpy as jnp
from jax.experimental import pallas as pl
from jax.experimental.pallas import tpu as pltpu


RELATION_KEYS = ("lr", "mr", "cr")


def _round_up(x, m):
    return (x + m - 1) // m * m


# -----------------------------------------------------------------------------
# Fused Pallas kernel: all three 2-layer MLP heads + cr log-softmax
# -----------------------------------------------------------------------------
def _drg_fused_kernel(x_ref, w0t_ref, b0_ref, w1t_ref, b1_ref, out_ref,
                      *, cr_start, cr_end):
    # Layer 0 for all heads at once: bf16 x bf16 -> f32 acc, [TN, D0]x[D0, H_pad].
    h = jnp.dot(x_ref[...], w0t_ref[...], preferred_element_type=jnp.float32)
    h = jnp.maximum(h + b0_ref[...], 0.0)
    # bf16 intermediate: halves h vreg/store traffic and keeps the second dot
    # on the bf16 MXU path (matters most on v5e: 128x128 MXU, single vst slot).
    h = h.astype(jnp.bfloat16)

    # Layer 1 (block-diagonal over heads): [TN, H_pad] x [H_pad, D2_pad].
    y = jnp.dot(h, w1t_ref[...], preferred_element_type=jnp.float32)
    y = y + b1_ref[...]

    # Numerically-stable log-softmax restricted to the 'cr' class columns.
    # Mask is built from a [1, D2_pad] iota and broadcast in the where.
    col = jax.lax.broadcasted_iota(jnp.int32, (1, y.shape[1]), 1)
    cr_mask = (col >= cr_start) & (col < cr_end)
    y_cr = jnp.where(cr_mask, y, -jnp.inf)
    m = jnp.max(y_cr, axis=1, keepdims=True)
    s = jnp.sum(jnp.exp(y_cr - m), axis=1, keepdims=True)   # exp(-inf)=0 off-slice
    lse = jnp.log(s) + m
    y = jnp.where(cr_mask, y - lse, y)

    out_ref[...] = y.astype(out_ref.dtype)


# -----------------------------------------------------------------------------
# Glue: pack per-head nn.Linear params into fused / padded matrices
# -----------------------------------------------------------------------------
def build_fused_params(params, lane=128):
    """params[k] = [(w0, b0), (w1, b1)] in PyTorch nn.Linear layout."""
    d0 = params[RELATION_KEYS[0]][0][0].shape[1]
    hid = {k: params[k][0][0].shape[0] for k in RELATION_KEYS}
    out = {k: params[k][1][0].shape[0] for k in RELATION_KEYS}

    h_total = sum(hid.values())
    d2_total = sum(out.values())
    h_pad = _round_up(h_total, lane)     # 192 -> 256 (one v6e/v7x MXU pass)
    d2_pad = _round_up(d2_total, lane)   # 10  -> 128 (lane floor, unmasked vst)

    w0t = jnp.zeros((d0, h_pad), jnp.float32)
    b0 = jnp.zeros((1, h_pad), jnp.float32)
    w1t = jnp.zeros((h_pad, d2_pad), jnp.float32)
    b1 = jnp.zeros((1, d2_pad), jnp.float32)

    out_slices = {}
    h_off = 0
    o_off = 0
    for k in RELATION_KEYS:
        (w0k, b0k), (w1k, b1k) = params[k]
        hk = w0k.shape[0]
        ok = w1k.shape[0]
        w0t = w0t.at[:, h_off:h_off + hk].set(jnp.asarray(w0k, jnp.float32).T)
        b0 = b0.at[0, h_off:h_off + hk].set(jnp.asarray(b0k, jnp.float32))
        w1t = w1t.at[h_off:h_off + hk, o_off:o_off + ok].set(
            jnp.asarray(w1k, jnp.float32).T)
        b1 = b1.at[0, o_off:o_off + ok].set(jnp.asarray(b1k, jnp.float32))
        out_slices[k] = (o_off, ok)
        h_off += hk
        o_off += ok

    cr_start, cr_width = out_slices["cr"]
    return {
        # bf16 weights: MXU-native everywhere, half the resident VMEM bytes.
        "w0t": w0t.astype(jnp.bfloat16),
        "b0": b0,
        "w1t": w1t.astype(jnp.bfloat16),
        "b1": b1,
        "out_slices": out_slices,
        "cr_start": int(cr_start), "cr_end": int(cr_start + cr_width),
        "d0": int(d0), "h_pad": int(h_pad), "d2_pad": int(d2_pad),
    }


def drg_fused_heads(x, fused, *, tile_n=1024, out_dtype=jnp.bfloat16,
                    small_n_threshold=128):
    """Runs all three relation-classifier heads in one fused pallas_call."""
    n, d0 = x.shape
    assert d0 == fused["d0"]
    h_pad = fused["h_pad"]
    d2_pad = fused["d2_pad"]
    cs, ce = fused["cr_start"], fused["cr_end"]

    if n < small_n_threshold:
        # Tiny-N fast path: kernel launch/pipeline overhead (a few us) dwarfs
        # the math at this size -- plain JAX is cheaper and exact.
        xf = x.astype(jnp.float32)
        h = jnp.maximum(xf @ fused["w0t"].astype(jnp.float32) + fused["b0"], 0.0)
        y = h @ fused["w1t"].astype(jnp.float32) + fused["b1"]
        y = y.at[:, cs:ce].set(jax.nn.log_softmax(y[:, cs:ce], axis=1))
        out = y.astype(out_dtype)
    else:
        # bf16 activations: halves the x DMA and feeds the MXU natively.
        # TODO(synk): the upstream graphical branch should emit bf16 directly.
        x_in = x if x.dtype == jnp.bfloat16 else x.astype(jnp.bfloat16)

        # Row tiling.  No jnp.pad copy of x: the partial last block is handled
        # by Pallas (its garbage rows are never written back).  tn is capped
        # so the grid has >= 2 steps -> the "parallel" axis shards across both
        # v7x TensorCores; costs nothing on single-TC v5e/v6e.
        n8 = _round_up(n, 8)
        half = _round_up(pl.cdiv(n8, 2), 8)
        tn = max(8, min(tile_n, half))
        grid = (pl.cdiv(n, tn),)

        # Per-step VMEM: bf16 x tile (2*tn*d0) + bf16/f32 out tile, both
        # double-buffered, plus ~160 KiB of resident weights -> well under
        # 2 MiB at tn=1024 and <4 MiB even at tn=4096, far inside the 32 MiB
        # scoped default on every generation (v7x's 64 MiB VMEM included).

        kernel = functools.partial(_drg_fused_kernel, cr_start=cs, cr_end=ce)

        out_itemsize = jnp.dtype(out_dtype).itemsize
        flops = 2 * n * (d0 * h_pad + h_pad * d2_pad)
        transcendentals = n * (d2_pad + 1)          # 128-lane exp vreg + log, per row
        bytes_accessed = (2 * n * d0                # bf16 x read
                          + out_itemsize * n * d2_pad
                          + 2 * (d0 * h_pad + h_pad * d2_pad)   # bf16 weights
                          + 4 * (h_pad + d2_pad))               # f32 biases

        out = pl.pallas_call(
            kernel,
            out_shape=jax.ShapeDtypeStruct((n, d2_pad), out_dtype),
            grid=grid,
            in_specs=[
                pl.BlockSpec((tn, d0), lambda i: (i, 0)),        # x: row-tiled
                pl.BlockSpec((d0, h_pad), lambda i: (0, 0)),     # fused W0^T (resident)
                pl.BlockSpec((1, h_pad), lambda i: (0, 0)),      # fused b0
                pl.BlockSpec((h_pad, d2_pad), lambda i: (0, 0)), # block-diag W1^T
                pl.BlockSpec((1, d2_pad), lambda i: (0, 0)),     # fused b1
            ],
            out_specs=pl.BlockSpec((tn, d2_pad), lambda i: (i, 0)),
            compiler_params=pltpu.CompilerParams(
                dimension_semantics=("parallel",)),
            cost_estimate=pl.CostEstimate(
                flops=flops,
                transcendentals=transcendentals,
                bytes_accessed=bytes_accessed),
        )(x_in, fused["w0t"], fused["b0"], fused["w1t"], fused["b1"])

    # Slice each head's logits back out of the lane-dense slab.
    res = {}
    for k, (off, width) in fused["out_slices"].items():
        res[k] = out[:, off:off + width]
    return res


# -----------------------------------------------------------------------------
# Parameter construction (deterministic, mirrors DRG.__init__ shapes)
# -----------------------------------------------------------------------------
def make_config(feature_dim=32, hidden=64, n_binary=2, n_classes=6):
    return {
        "graphical_branch_lr_classifier_dimension": [feature_dim, hidden, n_binary],
        "graphical_branch_mr_classifier_dimension": [feature_dim, hidden, n_binary],
        "graphical_branch_cr_classifier_dimension": [feature_dim, hidden, n_classes],
    }


def init_classifier_params(key, dims):
    """nn.Linear-style init (uniform(-1/sqrt(fan_in), 1/sqrt(fan_in)))."""
    params = []
    for i in range(len(dims) - 1):
        fan_in, fan_out = dims[i], dims[i + 1]
        key, kw, kb = jax.random.split(key, 3)
        bound = 1.0 / jnp.sqrt(fan_in)
        w = jax.random.uniform(kw, (fan_out, fan_in), jnp.float32, -bound, bound)
        b = jax.random.uniform(kb, (fan_out,), jnp.float32, -bound, bound)
        params.append((w, b))
    return params


def init_drg_params(key, config):
    params = {}
    for k in RELATION_KEYS:
        key, sub = jax.random.split(key)
        dims = config["graphical_branch_" + k + "_classifier_dimension"]
        params[k] = init_classifier_params(sub, dims)
    return params


# -----------------------------------------------------------------------------
# DRG forward
# -----------------------------------------------------------------------------
def drg_forward(data_item, fused_params):
    # TODO(synk): spatial/graphical branches undefined in the reference source;
    # data_item stands in for the paired graphical feature [num_pairs, D0].
    graphical_branch_output_paired = data_item
    res_graphical = drg_fused_heads(graphical_branch_output_paired, fused_params)
    return {"combined": res_graphical}


# -----------------------------------------------------------------------------
# Reference (pure JAX, f32) for a sanity check
# -----------------------------------------------------------------------------
def _ref_classifier(x, w0, b0, w1, b1, log_softmax):
    h = jnp.maximum(x @ w0.T + b0, 0.0)
    y = h @ w1.T + b1
    if log_softmax:
        y = jax.nn.log_softmax(y, axis=1)
    return y


if __name__ == "__main__":
    key = jax.random.PRNGKey(0)
    k_params, k_x = jax.random.split(key)

    num_pairs = 300          # > fast-path threshold: 2 grid steps + partial last block
    feature_dim = 32
    config = make_config(feature_dim=feature_dim, hidden=64,
                         n_binary=2, n_classes=6)
    params = init_drg_params(k_params, config)
    fused = build_fused_params(params)

    # Paired graphical feature (stand-in data_item): [num_pairs, feature_dim]
    x = jax.random.normal(k_x, (num_pairs, feature_dim), jnp.float32)

    out = drg_forward(x, fused)
    out = jax.tree_util.tree_map(jax.block_until_ready, out)

    # Sanity-check against a pure-JAX f32 per-head reference (bf16 datapath
    # => loosened tolerance).
    ok = True
    for k in RELATION_KEYS:
        (w0, b0), (w1, b1) = params[k]
        ref = _ref_classifier(x, w0, b0, w1, b1, log_softmax=(k == "cr"))
        got = out["combined"][k].astype(jnp.float32)
        if got.shape != ref.shape or not jnp.allclose(got, ref, atol=5e-2, rtol=5e-2):
            ok = False

    print("KERNEL_OK" if ok else "KERNEL_MISMATCH")
</pallas_src>

<mosaic_0001>
module attributes {stable_mosaic.version = 11 : i64} {
  func.func @_drg_fused_kernel(%arg0: i32, %arg1: memref<152x32xbf16, #tpu.memory_space<vmem>>, %arg2: memref<32x256xbf16, #tpu.memory_space<vmem>>, %arg3: memref<1x256xf32, #tpu.memory_space<vmem>>, %arg4: memref<256x128xbf16, #tpu.memory_space<vmem>>, %arg5: memref<1x128xf32, #tpu.memory_space<vmem>>, %arg6: memref<152x128xbf16, #tpu.memory_space<vmem>>) attributes {dimension_semantics = [#tpu.dimension_semantics<parallel>], iteration_bounds = array<i64: 2>, scalar_prefetch = 0 : i64, scratch_operands = 0 : i64, tpu.core_type = #tpu.core_type<tc>, window_params = [{transform_indices = @transform_0, window_bounds = array<i64: 152, 32>}, {pipeline_mode = #tpu.pipeline_mode<synchronous>, transform_indices = @transform_1, window_bounds = array<i64: 32, 256>}, {pipeline_mode = #tpu.pipeline_mode<synchronous>, transform_indices = @transform_2, window_bounds = array<i64: 1, 256>}, {pipeline_mode = #tpu.pipeline_mode<synchronous>, transform_indices = @transform_3, window_bounds = array<i64: 256, 128>}, {pipeline_mode = #tpu.pipeline_mode<synchronous>, transform_indices = @transform_4, window_bounds = array<i64: 1, 128>}, {transform_indices = @transform_5, window_bounds = array<i64: 152, 128>}]} {
    %c0 = arith.constant 0 : index
    %c0_0 = arith.constant 0 : index
    %0 = vector.load %arg1[%c0, %c0_0] : memref<152x32xbf16, #tpu.memory_space<vmem>>, vector<152x32xbf16>
    %c0_1 = arith.constant 0 : index
    %c0_2 = arith.constant 0 : index
    %1 = vector.load %arg2[%c0_1, %c0_2] : memref<32x256xbf16, #tpu.memory_space<vmem>>, vector<32x256xbf16>
    %cst = arith.constant dense<0.000000e+00> : vector<152x256xf32>
    %2 = tpu.matmul %0, %1, %cst {dimension_numbers = #tpu.dot_dimension_numbers<[1], [0], [0], [1], [0, 0, 1, 1], [], []>} : vector<152x32xbf16>, vector<32x256xbf16>, vector<152x256xf32> -> vector<152x256xf32>
    %c0_3 = arith.constant 0 : index
    %c0_4 = arith.constant 0 : index
    %3 = vector.load %arg3[%c0_3, %c0_4] : memref<1x256xf32, #tpu.memory_space<vmem>>, vector<1x256xf32>
    %4 = vector.broadcast %3 : vector<1x256xf32> to vector<152x256xf32>
    %5 = arith.addf %2, %4 : vector<152x256xf32>
    %cst_5 = arith.constant 0.000000e+00 : f32
    %6 = vector.broadcast %cst_5 : f32 to vector<152x256xf32>
    %7 = arith.maximumf %5, %6 : vector<152x256xf32>
    %8 = arith.truncf %7 : vector<152x256xf32> to vector<152x256xbf16>
    %c0_6 = arith.constant 0 : index
    %c0_7 = arith.constant 0 : index
    %9 = vector.load %arg4[%c0_6, %c0_7] : memref<256x128xbf16, #tpu.memory_space<vmem>>, vector<256x128xbf16>
    %cst_8 = arith.constant dense<0.000000e+00> : vector<152x128xf32>
    %10 = tpu.matmul %8, %9, %cst_8 {dimension_numbers = #tpu.dot_dimension_numbers<[1], [0], [0], [1], [0, 0, 1, 1], [], []>} : vector<152x256xbf16>, vector<256x128xbf16>, vector<152x128xf32> -> vector<152x128xf32>
    %c0_9 = arith.constant 0 : index
    %c0_10 = arith.constant 0 : index
    %11 = vector.load %arg5[%c0_9, %c0_10] : memref<1x128xf32, #tpu.memory_space<vmem>>, vector<1x128xf32>
    %12 = vector.broadcast %11 : vector<1x128xf32> to vector<152x128xf32>
    %13 = arith.addf %10, %12 : vector<152x128xf32>
    %14 = tpu.iota {dimensions = array<i32: 1>} : vector<1x128xi32>
    %c4_i32 = arith.constant 4 : i32
    %15 = vector.broadcast %c4_i32 : i32 to vector<1x128xi32>
    %16 = arith.cmpi sge, %14, %15 : vector<1x128xi32>
    %c10_i32 = arith.constant 10 : i32
    %17 = vector.broadcast %c10_i32 : i32 to vector<1x128xi32>
    %18 = arith.cmpi slt, %14, %17 : vector<1x128xi32>
    %19 = arith.andi %16, %18 : vector<1x128xi1>
    %cst_11 = arith.constant 0xFF800000 : f32
    %20 = vector.shape_cast %19 : vector<1x128xi1> to vector<1x128xi1>
    %21 = vector.broadcast %20 : vector<1x128xi1> to vector<152x128xi1>
    %22 = vector.broadcast %cst_11 : f32 to vector<152x128xf32>
    %23 = arith.select %21, %13, %22 : vector<152x128xi1>, vector<152x128xf32>
    %cst_12 = arith.constant dense<0xFF800000> : vector<152xf32>
    %24 = vector.multi_reduction <maximumf>, %23, %cst_12 [1] : vector<152x128xf32> to vector<152xf32>
    %25 = vector.shape_cast %24 : vector<152xf32> to vector<152x1xf32>
    %26 = vector.broadcast %25 : vector<152x1xf32> to vector<152x128xf32>
    %27 = arith.subf %23, %26 : vector<152x128xf32>
    %28 = math.exp %27 : vector<152x128xf32>
    %cst_13 = arith.constant dense<0.000000e+00> : vector<152xf32>
    %29 = vector.multi_reduction <add>, %28, %cst_13 [1] : vector<152x128xf32> to vector<152xf32>
    %30 = vector.shape_cast %29 : vector<152xf32> to vector<152x1xf32>
    %31 = math.log %30 : vector<152x1xf32>
    %32 = arith.addf %31, %25 : vector<152x1xf32>
    %33 = vector.broadcast %32 : vector<152x1xf32> to vector<152x128xf32>
    %34 = arith.subf %13, %33 : vector<152x128xf32>
    %35 = vector.shape_cast %19 : vector<1x128xi1> to vector<1x128xi1>
    %36 = vector.broadcast %35 : vector<1x128xi1> to vector<152x128xi1>
    %37 = arith.select %36, %34, %13 : vector<152x128xi1>, vector<152x128xf32>
    %38 = arith.truncf %37 : vector<152x128xf32> to vector<152x128xbf16>
    %c0_14 = arith.constant 0 : index
    %c0_15 = arith.constant 0 : index
    %39 = vector.load %arg6[%c0_14, %c0_15] : memref<152x128xbf16, #tpu.memory_space<vmem>>, vector<152x128xbf16>
    tpu.vector_store %arg6[%c0_14, %c0_15], %38 {strides = array<i32>} : memref<152x128xbf16, #tpu.memory_space<vmem>>, vector<152x128xbf16>,
    return
  }
  func.func @transform_0(%arg0: i32) -> (i32, i32) {
    %c0_i32 = arith.constant 0 : i32
    %c0_i32_0 = arith.constant 0 : i32
    return %arg0, %c0_i32 : i32, i32
  }
  func.func @transform_1(%arg0: i32) -> (i32, i32) {
    %c0_i32 = arith.constant 0 : i32
    %c0_i32_0 = arith.constant 0 : i32
    %c0_i32_1 = arith.constant 0 : i32
    return %c0_i32, %c0_i32_0 : i32, i32
  }
  func.func @transform_2(%arg0: i32) -> (i32, i32) {
    %c0_i32 = arith.constant 0 : i32
    %c0_i32_0 = arith.constant 0 : i32
    %c0_i32_1 = arith.constant 0 : i32
    return %c0_i32, %c0_i32_0 : i32, i32
  }
  func.func @transform_3(%arg0: i32) -> (i32, i32) {
    %c0_i32 = arith.constant 0 : i32
    %c0_i32_0 = arith.constant 0 : i32
    %c0_i32_1 = arith.constant 0 : i32
    return %c0_i32, %c0_i32_0 : i32, i32
  }
  func.func @transform_4(%arg0: i32) -> (i32, i32) {
    %c0_i32 = arith.constant 0 : i32
    %c0_i32_0 = arith.constant 0 : i32
    %c0_i32_1 = arith.constant 0 : i32
    return %c0_i32, %c0_i32_0 : i32, i32
  }
  func.func @transform_5(%arg0: i32) -> (i32, i32) {
    %c0_i32 = arith.constant 0 : i32
    %c0_i32_0 = arith.constant 0 : i32
    return %arg0, %c0_i32 : i32, i32
  }
}

</mosaic_0001>

<llo_original>
// kernel: tpu_custom_call.1
$region0: #{tpu_custom_call.1}
  #allocation0 [shape = 'u32[]', space=smem, size = 0x4, offset = 0x4, fixed_abs, tag = 'smem constant byte address 0x4 - core index']
  #allocation1 [shape = 'u32[144,128]{1,0:T(1,128)}', space=vmem, size = 0x12000, scoped, tag = 'internal scratch']
  %s0 = inlined_call_operand.vmem [shape: bf16[300,32], index: 0, kind: input, shape index: {}]
  %s1 = inlined_call_operand.vmem [shape: bf16[32,256], index: 1, kind: input, shape index: {}]
  %s2 = inlined_call_operand.vmem [shape: f32[1,256], index: 2, kind: input, shape index: {}]
  %s3 = inlined_call_operand.vmem [shape: bf16[256,128], index: 3, kind: input, shape index: {}]
  %s4 = inlined_call_operand.vmem [shape: f32[1,128], index: 4, kind: input, shape index: {}]
  %s5 = inlined_call_operand.hbm [shape: bf16[300,128], index: 5, kind: output, shape index: {}]
  %s6 = sld [smem:[#allocation0]]
  $region53: #{tpu_custom_call.1} parent=0
    _
  %s8 = ssub.s32 1, %s6
  %s9 = scalar_select 0, %s8, %s6
  $region1: #{tpu_custom_call.1} parent=0
    #allocation2 [shape = 'u8[77824]{0}', space=vmem, size = 0x13000, scoped, tag = 'output window, operand 0']
    #allocation3 [shape = 's32[2]{0}', space=sflag, size = 0x8, scoped, tag = 'scoped memory for tpu_custom_call.1']
    %10 = vsyncpa [#allocation3], 0
    %s11 = scalar_lea.sflag [#allocation3], 1
    %12 = vsyncpa %s11, 0
    loop: start=0, step=1, limit=4
    $region2: #{tpu_custom_call.1} parent=1 // loop_pre_header
      _
    $region3: #{tpu_custom_call.1} parent=1 // loop_header
      %s14 = sphi 0, %s18
      %p15 = scmp.ge.s32.totalorder %s14, 4
      %s24 = sphi 0, %s26
      %s27 = sphi 0, %s24
      %s28 = sphi 0, %s27
      %s44 = sphi 0, %s28
      %s48 = sphi 0, %s48
      %s50 = sphi 0, %s48
      %s51 = sphi 0, %s50
      %s65 = sphi 0, %s51
      %s69 = sphi 0, %s69
      %s71 = sphi 0, %s69
      %s72 = sphi 0, %s71
      %s86 = sphi 0, %s72
      %s90 = sphi 0, %s90
      %s92 = sphi 0, %s90
      %s93 = sphi 0, %s92
      %s107 = sphi 0, %s93
      %s111 = sphi 0, %s111
      %s113 = sphi 0, %s111
      %s114 = sphi 0, %s113
      %s128 = sphi 0, %s114
      %s134 = sphi 0, %s136
      %s137 = sphi 0, %s134
      %s138 = sphi 0, %s137
      %s154 = sphi 0, %s138
    $region4: #{tpu_custom_call.1} parent=1 // loop_header_branch
      %17 = sbr.rel (%p15) target = $region8
    $region5: #{tpu_custom_call.1} parent=1 // loop_body
      %s19 = ssub.s32 %s14, 1
      %s20 = ssub.s32 %s14, 2
      %s21 = sadd.s32 %s14, 1
      %s22 = ssub.s32 %s14, %s21
      %p23 = scmp.eq.s32.totalorder %s22, 0
      %s25 = sadd.s32 %s24, 1
      %s26 = scalar_select %p23, %s24, %s25
      %p29 = pneg %p23
      %p30 = scmp.eq.s32.totalorder %s14, 1
      %p31 = por %p29, %p30
      %p32 = scmp.ne.s32.totalorder %s24, %s27
      %p33 = scmp.eq.s32.totalorder %s14, 0
      %p34 = por %p32, %p33
      %p35 = scmp.ne.s32.totalorder %s24, %s27
      %p36 = scmp.eq.s32.totalorder %s19, 1
      %p37 = por %p35, %p36
      %p38 = scmp.ne.s32.totalorder %s27, %s28
      %p39 = scmp.eq.s32.totalorder %s19, 0
      %p40 = por %p38, %p39
      %p41 = scmp.ne.s32.totalorder %s27, %s28
      %p42 = scmp.eq.s32.totalorder %s20, 1
      %p43 = por %p41, %p42
      %p45 = scmp.ne.s32.totalorder %s28, %s44
      %p46 = scmp.eq.s32.totalorder %s20, 0
      %p47 = por %p45, %p46
      %s49 = sadd.s32 %s48, 1
      %p52 = scmp.eq.s32.totalorder %s14, 1
      %p53 = scmp.ne.s32.totalorder %s48, %s50
      %p54 = scmp.eq.s32.totalorder %s14, 0
      %p55 = por %p53, %p54
      %p56 = scmp.ne.s32.totalorder %s48, %s50
      %p57 = scmp.eq.s32.totalorder %s19, 1
      %p58 = por %p56, %p57
      %p59 = scmp.ne.s32.totalorder %s50, %s51
      %p60 = scmp.eq.s32.totalorder %s19, 0
      %p61 = por %p59, %p60
      %p62 = scmp.ne.s32.totalorder %s50, %s51
      %p63 = scmp.eq.s32.totalorder %s20, 1
      %p64 = por %p62, %p63
      %p66 = scmp.ne.s32.totalorder %s51, %s65
      %p67 = scmp.eq.s32.totalorder %s20, 0
      %p68 = por %p66, %p67
      %s70 = sadd.s32 %s69, 1
      %p73 = scmp.eq.s32.totalorder %s14, 1
      %p74 = scmp.ne.s32.totalorder %s69, %s71
      %p75 = scmp.eq.s32.totalorder %s14, 0
      %p76 = por %p74, %p75
      %p77 = scmp.ne.s32.totalorder %s69, %s71
      %p78 = scmp.eq.s32.totalorder %s19, 1
      %p79 = por %p77, %p78
      %p80 = scmp.ne.s32.totalorder %s71, %s72
      %p81 = scmp.eq.s32.totalorder %s19, 0
      %p82 = por %p80, %p81
      %p83 = scmp.ne.s32.totalorder %s71, %s72
      %p84 = scmp.eq.s32.totalorder %s20, 1
      %p85 = por %p83, %p84
      %p87 = scmp.ne.s32.totalorder %s72, %s86
      %p88 = scmp.eq.s32.totalorder %s20, 0
      %p89 = por %p87, %p88
      %s91 = sadd.s32 %s90, 1
      %p94 = scmp.eq.s32.totalorder %s14, 1
      %p95 = scmp.ne.s32.totalorder %s90, %s92
      %p96 = scmp.eq.s32.totalorder %s14, 0
      %p97 = por %p95, %p96
      %p98 = scmp.ne.s32.totalorder %s90, %s92
      %p99 = scmp.eq.s32.totalorder %s19, 1
      %p100 = por %p98, %p99
      %p101 = scmp.ne.s32.totalorder %s92, %s93
      %p102 = scmp.eq.s32.totalorder %s19, 0
      %p103 = por %p101, %p102
      %p104 = scmp.ne.s32.totalorder %s92, %s93
      %p105 = scmp.eq.s32.totalorder %s20, 1
      %p106 = por %p104, %p105
      %p108 = scmp.ne.s32.totalorder %s93, %s107
      %p109 = scmp.eq.s32.totalorder %s20, 0
      %p110 = por %p108, %p109
      %s112 = sadd.s32 %s111, 1
      %p115 = scmp.eq.s32.totalorder %s14, 1
      %p116 = scmp.ne.s32.totalorder %s111, %s113
      %p117 = scmp.eq.s32.totalorder %s14, 0
      %p118 = por %p116, %p117
      %p119 = scmp.ne.s32.totalorder %s111, %s113
      %p120 = scmp.eq.s32.totalorder %s19, 1
      %p121 = por %p119, %p120
      %p122 = scmp.ne.s32.totalorder %s113, %s114
      %p123 = scmp.eq.s32.totalorder %s19, 0
      %p124 = por %p122, %p123
      %p125 = scmp.ne.s32.totalorder %s113, %s114
      %p126 = scmp.eq.s32.totalorder %s20, 1
      %p127 = por %p125, %p126
      %p129 = scmp.ne.s32.totalorder %s114, %s128
      %p130 = scmp.eq.s32.totalorder %s20, 0
      %p131 = por %p129, %p130
      %s132 = ssub.s32 %s14, %s21
      %p133 = scmp.eq.s32.totalorder %s132, 0
      %s135 = sadd.s32 %s134, 1
      %s136 = scalar_select %p133, %s134, %s135
      %p139 = pneg %p133
      %p140 = scmp.eq.s32.totalorder %s14, 1
      %p141 = por %p139, %p140
      %p142 = scmp.ne.s32.totalorder %s134, %s137
      %p143 = scmp.eq.s32.totalorder %s14, 0
      %p144 = por %p142, %p143
      %p145 = scmp.ne.s32.totalorder %s134, %s137
      %p146 = scmp.eq.s32.totalorder %s19, 1
      %p147 = por %p145, %p146
      %p148 = scmp.ne.s32.totalorder %s137, %s138
      %p149 = scmp.eq.s32.totalorder %s19, 0
      %p150 = por %p148, %p149
      %p151 = scmp.ne.s32.totalorder %s137, %s138
      %p152 = scmp.eq.s32.totalorder %s20, 1
      %p153 = por %p151, %p152
      %p155 = scmp.ne.s32.totalorder %s138, %s154
      %p156 = scmp.eq.s32.totalorder %s20, 0
      %p157 = por %p155, %p156
      %p158 = scmp.le.s32.totalorder 1, %s14
      %p159 = scmp.lt.s32.totalorder %s14, 3
      %p160 = pnand %p158, %p159
      %p161 = pneg %p160
      // Predicated region
      $region9: #{tpu_custom_call.1} parent=5 // pred_check
        _
      $region10: #{tpu_custom_call.1} parent=5 // pred_check_branch
        %163 = sbr.rel (%p160) target = $region12
      $region11: #{tpu_custom_call.1} parent=5 // pred_region
        %s164 = ssub.s32 %s14, 1
        // Predicated region
        $region13: #{tpu_custom_call.1} parent=11 // pred_check
          %p165 = pneg %p61
        $region14: #{tpu_custom_call.1} parent=11 // pred_check_branch
          %167 = sbr.rel (%p165) target = $region16
        $region15: #{tpu_custom_call.1} parent=11 // pred_region
          _
        $region16: #{tpu_custom_call.1} parent=11 // pred_fallthru
          _
        // Predicated region
        $region17: #{tpu_custom_call.1} parent=11 // pred_check
          %p168 = pneg %p82
        $region18: #{tpu_custom_call.1} parent=11 // pred_check_branch
          %170 = sbr.rel (%p168) target = $region20
        $region19: #{tpu_custom_call.1} parent=11 // pred_region
          _
        $region20: #{tpu_custom_call.1} parent=11 // pred_fallthru
          _
        // Predicated region
        $region21: #{tpu_custom_call.1} parent=11 // pred_check
          %p171 = pneg %p103
        $region22: #{tpu_custom_call.1} parent=11 // pred_check_branch
          %173 = sbr.rel (%p171) target = $region24
        $region23: #{tpu_custom_call.1} parent=11 // pred_region
          _
        $region24: #{tpu_custom_call.1} parent=11 // pred_fallthru
          _
        // Predicated region
        $region25: #{tpu_custom_call.1} parent=11 // pred_check
          %p174 = pneg %p124
        $region26: #{tpu_custom_call.1} parent=11 // pred_check_branch
          %176 = sbr.rel (%p174) target = $region28
        $region27: #{tpu_custom_call.1} parent=11 // pred_region
          _
        $region28: #{tpu_custom_call.1} parent=11 // pred_fallthru
          _
      $region12: #{tpu_custom_call.1} parent=5 // pred_fallthru
        _
      %p177 = scmp.lt.s32.totalorder %s14, 2
      // Predicated region
      $region29: #{tpu_custom_call.1} parent=5 // pred_check
        %p178 = pneg %p177
      $region30: #{tpu_custom_call.1} parent=5 // pred_check_branch
        %180 = sbr.rel (%p178) target = $region32
      $region31: #{tpu_custom_call.1} parent=5 // pred_region
        // Predicated region
        $region33: #{tpu_custom_call.1} parent=31 // pred_check
          %p181 = pneg %p34
        $region34: #{tpu_custom_call.1} parent=31 // pred_check_branch
          %183 = sbr.rel (%p181) target = $region36
        $region35: #{tpu_custom_call.1} parent=31 // pred_region
          %s184 = smul.u32 19, %s14
          %p185 = scmp.lt.s32.totalorder %s184, 37
          %s186 = scalar_select %p185, %s184, 37
          %s187 = smul.addr %s186, 4
          %s188 = scalar_lea.vmem %s0, %s187
          %s189 = smul.u32 19, %s14
        $region36: #{tpu_custom_call.1} parent=31 // pred_fallthru
          _
      $region32: #{tpu_custom_call.1} parent=5 // pred_fallthru
        _
      %p190 = scmp.le.s32.totalorder 1, %s14
      %p191 = scmp.lt.s32.totalorder %s14, 3
      %p192 = pnand %p190, %p191
      %p193 = pneg %p192
      // Predicated region
      $region37: #{tpu_custom_call.1} parent=5 // pred_check
        _
      $region38: #{tpu_custom_call.1} parent=5 // pred_check_branch
        %195 = sbr.rel (%p192) target = $region40
      $region39: #{tpu_custom_call.1} parent=5 // pred_region
        %s196 = ssub.s32 %s14, 1
        %s197 = smul.u32 19, %s19
        %p198 = scmp.lt.s32.totalorder %s197, 37
        %s199 = scalar_select %p198, %s197, 37
        %s200 = smul.addr %s199, 4
        %s201 = scalar_lea.vmem %s0, %s200
        %p202 = pneg %p40
        %p203 = pneg %p37
        %p204 = pneg %p61
        %p205 = pneg %p58
        %p206 = pneg %p82
        %p207 = pneg %p79
        %p208 = pneg %p103
        %p209 = pneg %p100
        %p210 = pneg %p124
        %p211 = pneg %p121
        %p212 = pneg %p150
        %p213 = pneg %p147
        %s214 = sand.u32 %s137, 1
        %s215 = scalar_lea.sflag [#allocation3], %s214
        %s216 = sand.u32 %s137, 1
        %s217 = smul.addr %s216, 76
        %s218 = scalar_lea.vmem [#allocation2], %s217
        %s219 = smul.u32 19, %s19
        %p220 = scmp.lt.s32.totalorder %s219, 37
        %s221 = scalar_select %p220, %s219, 37
        %s222 = smul.addr %s221, 4
        %s223 = scalar_lea.vmem %s0, %s222
        %s224 = smul.u32 19, %s19
        %s225 = smul.u32 19, %s19
        %v227 = vld [vmem:[%s223] sm:$0xf]
        %v228 = vld [vmem:[%s223 + $0x4] sm:$0xf]
        %v229 = vld [vmem:[%s223 + $0x8] sm:$0xf]
        %v230 = vld [vmem:[%s223 + $0xc] sm:$0xf]
        %v231 = vld [vmem:[%s223 + $0x10] sm:$0xf]
        %v232 = vld [vmem:[%s223 + $0x14] sm:$0xf]
        %v233 = vld [vmem:[%s223 + $0x18] sm:$0xf]
        %v234 = vld [vmem:[%s223 + $0x1c] sm:$0xf]
        %v235 = vld [vmem:[%s223 + $0x20] sm:$0xf]
        %v236 = vld [vmem:[%s223 + $0x24] sm:$0xf]
        %v237 = vld [vmem:[%s223 + $0x28] sm:$0xf]
        %v238 = vld [vmem:[%s223 + $0x2c] sm:$0xf]
        %v239 = vld [vmem:[%s223 + $0x30] sm:$0xf]
        %v240 = vld [vmem:[%s223 + $0x34] sm:$0xf]
        %v241 = vld [vmem:[%s223 + $0x38] sm:$0xf]
        %v242 = vld [vmem:[%s223 + $0x3c] sm:$0xf]
        %v243 = vld [vmem:[%s223 + $0x40] sm:$0xf]
        %v244 = vld [vmem:[%s223 + $0x44] sm:$0xf]
        %v245 = vld [vmem:[%s223 + $0x48] sm:$0xf]
        %v246 = vld [vmem:[%s1] sm:$0xff]
        %v247 = vld [vmem:[%s1 + $0x8] sm:$0xff]
        %v248 = vld [vmem:[%s1 + $0x10] sm:$0xff]
        %v249 = vld [vmem:[%s1 + $0x18] sm:$0xff]
        %v250 = vld [vmem:[%s2] sm:$0x3]
        %v252 = vlaneseq
        %v253 = vshrl.u32 %v252, 7
        %v254 = vsub.s32 0, %v253
        %v255 = vrot.slane %v250, %v254
        %v256 = vlaneseq
        %v257 = vshrl.u32 %v256, 7
        %v258 = vsub.s32 1, %v257
        %v259 = vrot.slane %v250, %v258
        %v281 = vunpack.c.l.b16 %v227
        %v282 = vunpack.c.l.b16 %v228
        %v283 = vunpack.c.l.b16 %v229
        %v284 = vunpack.c.l.b16 %v230
        %v285 = vunpack.c.l.b16 %v231
        %v286 = vunpack.c.l.b16 %v232
        %v287 = vunpack.c.l.b16 %v233
        %v288 = vunpack.c.l.b16 %v234
        %v289 = vunpack.c.l.b16 %v235
        %v290 = vunpack.c.l.b16 %v236
        %v291 = vunpack.c.l.b16 %v237
        %v292 = vunpack.c.l.b16 %v238
        %v293 = vunpack.c.l.b16 %v239
        %v294 = vunpack.c.l.b16 %v240
        %v295 = vunpack.c.l.b16 %v241
        %v296 = vunpack.c.l.b16 %v242
        %v297 = vunpack.c.l.b16 %v243
        %v298 = vunpack.c.l.b16 %v244
        %v299 = vunpack.c.l.b16 %v245
        %v300 = vpack.c.b16 %v282, %v281
        %v301 = vpack.c.b16 %v284, %v283
        %v302 = vpack.c.b16 %v286, %v285
        %v303 = vpack.c.b16 %v288, %v287
        %v304 = vpack.c.b16 %v290, %v289
        %v305 = vpack.c.b16 %v292, %v291
        %v306 = vpack.c.b16 %v294, %v293
        %v307 = vpack.c.b16 %v296, %v295
        %v308 = vpack.c.b16 %v298, %v297
        %v309 = vpack.c.b16 %v299, %v299
        %v314 = vunpack.c.l.b16 %v246
        %v315 = vunpack.c.h.b16 %v246
        %v316 = vunpack.c.l.b16 %v247
        %v317 = vunpack.c.h.b16 %v247
        %v318 = vunpack.c.l.b16 %v248
        %v319 = vunpack.c.h.b16 %v248
        %v320 = vunpack.c.l.b16 %v249
        %v321 = vunpack.c.h.b16 %v249
        %v322 = vpack.c.b16 %v316, %v314
        %v323 = vpack.c.b16 %v317, %v315
        %v324 = vpack.c.b16 %v320, %v318
        %v325 = vpack.c.b16 %v321, %v319
        %vm330 = vcmask 261120
        %v332 = vsel %vm330, %v300, 0
        %v335 = vsel %vm330, %v301, 0
        %v338 = vsel %vm330, %v302, 0
        %v341 = vsel %vm330, %v303, 0
        %v344 = vsel %vm330, %v304, 0
        %v347 = vsel %vm330, %v305, 0
        %v350 = vsel %vm330, %v306, 0
        %v353 = vsel %vm330, %v307, 0
        %v356 = vsel %vm330, %v308, 0
        %v359 = vsel %vm330, %v309, 0
        %361 = vmatprep.subr.bf16.mxu0 %v323
        %362 = vmatpush1.bf16.msra.mxu0 %v322
        %363 = vmatprep.subr.bf16.mxu0 %v325
        %364 = vmatpush1.bf16.msra.mxu0 %v324
        %365 = vmatprep.subr.bf16.mxu0 0
        %366 = vmatpush1.bf16.msra.mxu0 0
        %367 = vmatprep.subr.bf16.mxu0 0
        %368 = vmatpush1.bf16.msra.mxu0 0
        %369 = vmatprep.subr.bf16.mxu0 0
        %370 = vmatpush1.bf16.msra.mxu0 0
        %371 = vmatprep.subr.bf16.mxu0 0
        %372 = vmatpush1.bf16.msra.mxu0 0
        %373 = vmatprep.subr.bf16.mxu0 0
        %374 = vmatpush1.bf16.msra.mxu0 0
        %375 = vmatprep.subr.bf16.mxu0 0
        %376 = vmatpush1.bf16.msra.mxu0 0
        %377 = vmatprep.subr.bf16.mxu0 0
        %378 = vmatpush1.bf16.msra.mxu0 0
        %379 = vmatprep.subr.bf16.mxu0 0
        %380 = vmatpush1.bf16.msra.mxu0 0
        %381 = vmatprep.subr.bf16.mxu0 0
        %382 = vmatpush1.bf16.msra.mxu0 0
        %383 = vmatprep.subr.bf16.mxu0 0
        %384 = vmatpush1.bf16.msra.mxu0 0
        %385 = vmatprep.subr.bf16.mxu0 0
        %386 = vmatpush1.bf16.msra.mxu0 0
        %387 = vmatprep.subr.bf16.mxu0 0
        %388 = vmatpush1.bf16.msra.mxu0 0
        %389 = vmatprep.subr.bf16.mxu0 0
        %390 = vmatpush1.bf16.msra.mxu0 0
        %391 = vmatprep.subr.bf16.mxu0 0
        %392 = vmatpush1.bf16.msra.mxu0 0
        %393 = vmatprep.mubr.bf16.mxu0 0
        %394 = vmatmul.mubr.bf16.gmra.mrb[0].mxu0 %v332
        %v395 = vpop.f32.mrb[0].mxu0
        %v396 = vadd.f32 %v255, %v395
        %v397 = vpop.f32.mrb[0].mxu0
        %v398 = vadd.f32 %v259, %v397
        %v399 = vpop.f32.mrb[0].mxu0
        %v400 = vadd.f32 %v255, %v399
        %v401 = vpop.f32.mrb[0].mxu0
        %v402 = vadd.f32 %v259, %v401
        %403 = vmatprep.mubr.bf16.mxu0 0
        %404 = vmatmul.mubr.bf16.gmra.mrb[0].mxu0 %v335
        %v405 = vpop.f32.mrb[0].mxu0
        %v406 = vadd.f32 %v255, %v405
        %v407 = vpop.f32.mrb[0].mxu0
        %v408 = vadd.f32 %v259, %v407
        %v409 = vpop.f32.mrb[0].mxu0
        %v410 = vadd.f32 %v255, %v409
        %v411 = vpop.f32.mrb[0].mxu0
        %v412 = vadd.f32 %v259, %v411
        %413 = vmatprep.mubr.bf16.mxu0 0
        %414 = vmatmul.mubr.bf16.gmra.mrb[0].mxu0 %v338
        %v415 = vpop.f32.mrb[0].mxu0
        %v416 = vadd.f32 %v255, %v415
        %v417 = vpop.f32.mrb[0].mxu0
        %v418 = vadd.f32 %v259, %v417
        %v419 = vpop.f32.mrb[0].mxu0
        %v420 = vadd.f32 %v255, %v419
        %v421 = vpop.f32.mrb[0].mxu0
        %v422 = vadd.f32 %v259, %v421
        %423 = vmatprep.mubr.bf16.mxu0 0
        %424 = vmatmul.mubr.bf16.gmra.mrb[0].mxu0 %v341
        %v425 = vpop.f32.mrb[0].mxu0
        %v426 = vadd.f32 %v255, %v425
        %v427 = vpop.f32.mrb[0].mxu0
        %v428 = vadd.f32 %v259, %v427
        %v429 = vpop.f32.mrb[0].mxu0
        %v430 = vadd.f32 %v255, %v429
        %v431 = vpop.f32.mrb[0].mxu0
        %v432 = vadd.f32 %v259, %v431
        %433 = vmatprep.mubr.bf16.mxu0 0
        %434 = vmatmul.mubr.bf16.gmra.mrb[0].mxu0 %v344
        %v435 = vpop.f32.mrb[0].mxu0
        %v436 = vadd.f32 %v255, %v435
        %v437 = vpop.f32.mrb[0].mxu0
        %v438 = vadd.f32 %v259, %v437
        %v439 = vpop.f32.mrb[0].mxu0
        %v440 = vadd.f32 %v255, %v439
        %v441 = vpop.f32.mrb[0].mxu0
        %v442 = vadd.f32 %v259, %v441
        %443 = vmatprep.mubr.bf16.mxu0 0
        %444 = vmatmul.mubr.bf16.gmra.mrb[0].mxu0 %v347
        %v445 = vpop.f32.mrb[0].mxu0
        %v446 = vadd.f32 %v255, %v445
        %v447 = vpop.f32.mrb[0].mxu0
        %v448 = vadd.f32 %v259, %v447
        %v449 = vpop.f32.mrb[0].mxu0
        %v450 = vadd.f32 %v255, %v449
        %v451 = vpop.f32.mrb[0].mxu0
        %v452 = vadd.f32 %v259, %v451
        %453 = vmatprep.mubr.bf16.mxu0 0
        %454 = vmatmul.mubr.bf16.gmra.mrb[0].mxu0 %v350
        %v455 = vpop.f32.mrb[0].mxu0
        %v456 = vadd.f32 %v255, %v455
        %v457 = vpop.f32.mrb[0].mxu0
        %v458 = vadd.f32 %v259, %v457
        %v459 = vpop.f32.mrb[0].mxu0
        %v460 = vadd.f32 %v255, %v459
        %v461 = vpop.f32.mrb[0].mxu0
        %v462 = vadd.f32 %v259, %v461
        %463 = vmatprep.mubr.bf16.mxu0 0
        %464 = vmatmul.mubr.bf16.gmra.mrb[0].mxu0 %v353
        %v465 = vpop.f32.mrb[0].mxu0
        %v466 = vadd.f32 %v255, %v465
        %v467 = vpop.f32.mrb[0].mxu0
        %v468 = vadd.f32 %v259, %v467
        %v469 = vpop.f32.mrb[0].mxu0
        %v470 = vadd.f32 %v255, %v469
        %v471 = vpop.f32.mrb[0].mxu0
        %v472 = vadd.f32 %v259, %v471
        %473 = vmatprep.mubr.bf16.mxu0 0
        %474 = vmatmul.mubr.bf16.gmra.mrb[0].mxu0 %v356
        %v475 = vpop.f32.mrb[0].mxu0
        %v476 = vadd.f32 %v255, %v475
        %v477 = vpop.f32.mrb[0].mxu0
        %v478 = vadd.f32 %v259, %v477
        %v479 = vpop.f32.mrb[0].mxu0
        %v480 = vadd.f32 %v255, %v479
        %v481 = vpop.f32.mrb[0].mxu0
        %v482 = vadd.f32 %v259, %v481
        %483 = vmatprep.mubr.bf16.mxu0 0
        %484 = vmatmul.mubr.bf16.gmra.mrb[0].mxu0 %v359
        %v485 = vpop.f32.mrb[0].mxu0
        %v486 = vadd.f32 %v255, %v485
        %v487 = vpop.f32.mrb[0].mxu0
        %v488 = vadd.f32 %v259, %v487
        %v489 = vpop.f32.mrb[0].mxu0
        %v490 = vpop.f32.mrb[0].mxu0
        %491 = vdwg.mxu0
        %v492 = vmax.f32 %v396, 0.0
        %v493 = vmax.f32 %v398, 0.0
        %v494 = vmax.f32 %v400, 0.0
        %v495 = vmax.f32 %v402, 0.0
        %v496 = vmax.f32 %v406, 0.0
        %v497 = vmax.f32 %v408, 0.0
        %v498 = vmax.f32 %v410, 0.0
        %v499 = vmax.f32 %v412, 0.0
        %v500 = vmax.f32 %v416, 0.0
        %v501 = vmax.f32 %v418, 0.0
        %v502 = vmax.f32 %v420, 0.0
        %v503 = vmax.f32 %v422, 0.0
        %v504 = vmax.f32 %v426, 0.0
        %v505 = vmax.f32 %v428, 0.0
        %v506 = vmax.f32 %v430, 0.0
        %v507 = vmax.f32 %v432, 0.0
        %v508 = vmax.f32 %v436, 0.0
        %v509 = vmax.f32 %v438, 0.0
        %v510 = vmax.f32 %v440, 0.0
        %v511 = vmax.f32 %v442, 0.0
        %v512 = vmax.f32 %v446, 0.0
        %v513 = vmax.f32 %v448, 0.0
        %v514 = vmax.f32 %v450, 0.0
        %v515 = vmax.f32 %v452, 0.0
        %v516 = vmax.f32 %v456, 0.0
        %v517 = vmax.f32 %v458, 0.0
        %v518 = vmax.f32 %v460, 0.0
        %v519 = vmax.f32 %v462, 0.0
        %v520 = vmax.f32 %v466, 0.0
        %v521 = vmax.f32 %v468, 0.0
        %v522 = vmax.f32 %v470, 0.0
        %v523 = vmax.f32 %v472, 0.0
        %v524 = vmax.f32 %v476, 0.0
        %v525 = vmax.f32 %v478, 0.0
        %v526 = vmax.f32 %v480, 0.0
        %v527 = vmax.f32 %v482, 0.0
        %v528 = vmax.f32 %v486, 0.0
        %v529 = vmax.f32 %v488, 0.0
        %v530 = vpack.c.bf16 %v494, %v492
        %v531 = vpack.c.bf16 %v495, %v493
        %v532 = vpack.c.bf16 %v498, %v496
        %v533 = vpack.c.bf16 %v499, %v497
        %v534 = vpack.c.bf16 %v502, %v500
        %v535 = vpack.c.bf16 %v503, %v501
        %v536 = vpack.c.bf16 %v506, %v504
        %v537 = vpack.c.bf16 %v507, %v505
        %v538 = vpack.c.bf16 %v510, %v508
        %v539 = vpack.c.bf16 %v511, %v509
        %v540 = vpack.c.bf16 %v514, %v512
        %v541 = vpack.c.bf16 %v515, %v513
        %v542 = vpack.c.bf16 %v518, %v516
        %v543 = vpack.c.bf16 %v519, %v517
        %v544 = vpack.c.bf16 %v522, %v520
        %v545 = vpack.c.bf16 %v523, %v521
        %v546 = vpack.c.bf16 %v526, %v524
        %v547 = vpack.c.bf16 %v527, %v525
        %v548 = vpack.c.bf16 %v528, %v528
        %v549 = vpack.c.bf16 %v529, %v529
        %v550 = vld [vmem:[%s3] sm:$0xf]
        %v551 = vld [vmem:[%s3 + $0x4] sm:$0xf]
        %v552 = vld [vmem:[%s3 + $0x8] sm:$0xf]
        %v553 = vld [vmem:[%s3 + $0xc] sm:$0xf]
        %v554 = vld [vmem:[%s3 + $0x10] sm:$0xf]
        %v555 = vld [vmem:[%s3 + $0x14] sm:$0xf]
        %v556 = vld [vmem:[%s3 + $0x18] sm:$0xf]
        %v557 = vld [vmem:[%s3 + $0x1c] sm:$0xf]
        %v558 = vld [vmem:[%s3 + $0x20] sm:$0xf]
        %v559 = vld [vmem:[%s3 + $0x24] sm:$0xf]
        %v560 = vld [vmem:[%s3 + $0x28] sm:$0xf]
        %v561 = vld [vmem:[%s3 + $0x2c] sm:$0xf]
        %v562 = vld [vmem:[%s3 + $0x30] sm:$0xf]
        %v563 = vld [vmem:[%s3 + $0x34] sm:$0xf]
        %v564 = vld [vmem:[%s3 + $0x38] sm:$0xf]
        %v565 = vld [vmem:[%s3 + $0x3c] sm:$0xf]
        %v566 = vld [vmem:[%s3 + $0x40] sm:$0xf]
        %v567 = vld [vmem:[%s3 + $0x44] sm:$0xf]
        %v568 = vld [vmem:[%s3 + $0x48] sm:$0xf]
        %v569 = vld [vmem:[%s3 + $0x4c] sm:$0xf]
        %v570 = vld [vmem:[%s3 + $0x50] sm:$0xf]
        %v571 = vld [vmem:[%s3 + $0x54] sm:$0xf]
        %v572 = vld [vmem:[%s3 + $0x58] sm:$0xf]
        %v573 = vld [vmem:[%s3 + $0x5c] sm:$0xf]
        %v574 = vld [vmem:[%s3 + $0x60] sm:$0xf]
        %v575 = vld [vmem:[%s3 + $0x64] sm:$0xf]
        %v576 = vld [vmem:[%s3 + $0x68] sm:$0xf]
        %v577 = vld [vmem:[%s3 + $0x6c] sm:$0xf]
        %v578 = vld [vmem:[%s3 + $0x70] sm:$0xf]
        %v579 = vld [vmem:[%s3 + $0x74] sm:$0xf]
        %v580 = vld [vmem:[%s3 + $0x78] sm:$0xf]
        %v581 = vld [vmem:[%s3 + $0x7c] sm:$0xf]
        %v582 = vld [vmem:[%s4] sm:$0x1]
        %v584 = vlaneseq
        %v585 = vshrl.u32 %v584, 7
        %v586 = vsub.s32 0, %v585
        %v587 = vrot.slane %v582, %v586
        %v621 = vunpack.c.l.b16 %v550
        %v622 = vunpack.c.l.b16 %v551
        %v623 = vunpack.c.l.b16 %v552
        %v624 = vunpack.c.l.b16 %v553
        %v625 = vunpack.c.l.b16 %v554
        %v626 = vunpack.c.l.b16 %v555
        %v627 = vunpack.c.l.b16 %v556
        %v628 = vunpack.c.l.b16 %v557
        %v629 = vunpack.c.l.b16 %v558
        %v630 = vunpack.c.l.b16 %v559
        %v631 = vunpack.c.l.b16 %v560
        %v632 = vunpack.c.l.b16 %v561
        %v633 = vunpack.c.l.b16 %v562
        %v634 = vunpack.c.l.b16 %v563
        %v635 = vunpack.c.l.b16 %v564
        %v636 = vunpack.c.l.b16 %v565
        %v637 = vunpack.c.l.b16 %v566
        %v638 = vunpack.c.l.b16 %v567
        %v639 = vunpack.c.l.b16 %v568
        %v640 = vunpack.c.l.b16 %v569
        %v641 = vunpack.c.l.b16 %v570
        %v642 = vunpack.c.l.b16 %v571
        %v643 = vunpack.c.l.b16 %v572
        %v644 = vunpack.c.l.b16 %v573
        %v645 = vunpack.c.l.b16 %v574
        %v646 = vunpack.c.l.b16 %v575
        %v647 = vunpack.c.l.b16 %v576
        %v648 = vunpack.c.l.b16 %v577
        %v649 = vunpack.c.l.b16 %v578
        %v650 = vunpack.c.l.b16 %v579
        %v651 = vunpack.c.l.b16 %v580
        %v652 = vunpack.c.l.b16 %v581
        %v653 = vpack.c.b16 %v622, %v621
        %v654 = vpack.c.b16 %v624, %v623
        %v655 = vpack.c.b16 %v626, %v625
        %v656 = vpack.c.b16 %v628, %v627
        %v657 = vpack.c.b16 %v630, %v629
        %v658 = vpack.c.b16 %v632, %v631
        %v659 = vpack.c.b16 %v634, %v633
        %v660 = vpack.c.b16 %v636, %v635
        %v661 = vpack.c.b16 %v638, %v637
        %v662 = vpack.c.b16 %v640, %v639
        %v663 = vpack.c.b16 %v642, %v641
        %v664 = vpack.c.b16 %v644, %v643
        %v665 = vpack.c.b16 %v646, %v645
        %v666 = vpack.c.b16 %v648, %v647
        %v667 = vpack.c.b16 %v650, %v649
        %v668 = vpack.c.b16 %v652, %v651
        %685 = vmatprep.subr.bf16.mxu0 0
        %686 = vmatpush1.bf16.msra.mxu0 %v653
        %687 = vmatprep.subr.bf16.mxu0 0
        %688 = vmatpush1.bf16.msra.mxu0 %v654
        %689 = vmatprep.subr.bf16.mxu0 0
        %690 = vmatpush1.bf16.msra.mxu0 %v655
        %691 = vmatprep.subr.bf16.mxu0 0
        %692 = vmatpush1.bf16.msra.mxu0 %v656
        %693 = vmatprep.subr.bf16.mxu0 0
        %694 = vmatpush1.bf16.msra.mxu0 %v657
        %695 = vmatprep.subr.bf16.mxu0 0
        %696 = vmatpush1.bf16.msra.mxu0 %v658
        %697 = vmatprep.subr.bf16.mxu0 0
        %698 = vmatpush1.bf16.msra.mxu0 %v659
        %699 = vmatprep.subr.bf16.mxu0 0
        %700 = vmatpush1.bf16.msra.mxu0 %v660
        %701 = vmatprep.subr.bf16.mxu0 0
        %702 = vmatpush1.bf16.msra.mxu0 %v661
        %703 = vmatprep.subr.bf16.mxu0 0
        %704 = vmatpush1.bf16.msra.mxu0 %v662
        %705 = vmatprep.subr.bf16.mxu0 0
        %706 = vmatpush1.bf16.msra.mxu0 %v663
        %707 = vmatprep.subr.bf16.mxu0 0
        %708 = vmatpush1.bf16.msra.mxu0 %v664
        %709 = vmatprep.subr.bf16.mxu0 0
        %710 = vmatpush1.bf16.msra.mxu0 %v665
        %711 = vmatprep.subr.bf16.mxu0 0
        %712 = vmatpush1.bf16.msra.mxu0 %v666
        %713 = vmatprep.subr.bf16.mxu0 0
        %714 = vmatpush1.bf16.msra.mxu0 %v667
        %715 = vmatprep.subr.bf16.mxu0 0
        %716 = vmatpush1.bf16.msra.mxu0 %v668
        %717 = vmatprep.mubr.bf16.mxu0 %v531
        %718 = vmatmul.mubr.bf16.gmra.mrb[0].mxu0 %v530
        %v719 = vpop.f32.mrb[0].mxu0
        %v720 = vadd.f32 %v587, %v719
        %v721 = vpop.f32.mrb[0].mxu0
        %v722 = vpop.f32.mrb[0].mxu0
        %v723 = vadd.f32 %v587, %v722
        %v724 = vpop.f32.mrb[0].mxu0
        %725 = vmatprep.mubr.bf16.mxu0 %v533
        %726 = vmatmul.mubr.bf16.gmra.mrb[0].mxu0 %v532
        %v727 = vpop.f32.mrb[0].mxu0
        %v728 = vadd.f32 %v587, %v727
        %v729 = vpop.f32.mrb[0].mxu0
        %v730 = vpop.f32.mrb[0].mxu0
        %v731 = vadd.f32 %v587, %v730
        %v732 = vpop.f32.mrb[0].mxu0
        %733 = vmatprep.mubr.bf16.mxu0 %v535
        %734 = vmatmul.mubr.bf16.gmra.mrb[0].mxu0 %v534
        %v735 = vpop.f32.mrb[0].mxu0
        %v736 = vadd.f32 %v587, %v735
        %v737 = vpop.f32.mrb[0].mxu0
        %v738 = vpop.f32.mrb[0].mxu0
        %v739 = vadd.f32 %v587, %v738
        %v740 = vpop.f32.mrb[0].mxu0
        %741 = vmatprep.mubr.bf16.mxu0 %v537
        %742 = vmatmul.mubr.bf16.gmra.mrb[0].mxu0 %v536
        %v743 = vpop.f32.mrb[0].mxu0
        %v744 = vadd.f32 %v587, %v743
        %v745 = vpop.f32.mrb[0].mxu0
        %v746 = vpop.f32.mrb[0].mxu0
        %v747 = vadd.f32 %v587, %v746
        %v748 = vpop.f32.mrb[0].mxu0
        %749 = vmatprep.mubr.bf16.mxu0 %v539
        %750 = vmatmul.mubr.bf16.gmra.mrb[0].mxu0 %v538
        %v751 = vpop.f32.mrb[0].mxu0
        %v752 = vadd.f32 %v587, %v751
        %v753 = vpop.f32.mrb[0].mxu0
        %v754 = vpop.f32.mrb[0].mxu0
        %v755 = vadd.f32 %v587, %v754
        %v756 = vpop.f32.mrb[0].mxu0
        %757 = vmatprep.mubr.bf16.mxu0 %v541
        %758 = vmatmul.mubr.bf16.gmra.mrb[0].mxu0 %v540
        %v759 = vpop.f32.mrb[0].mxu0
        %v760 = vadd.f32 %v587, %v759
        %v761 = vpop.f32.mrb[0].mxu0
        %v762 = vpop.f32.mrb[0].mxu0
        %v763 = vadd.f32 %v587, %v762
        %v764 = vpop.f32.mrb[0].mxu0
        %765 = vmatprep.mubr.bf16.mxu0 %v543
        %766 = vmatmul.mubr.bf16.gmra.mrb[0].mxu0 %v542
        %v767 = vpop.f32.mrb[0].mxu0
        %v768 = vadd.f32 %v587, %v767
        %v769 = vpop.f32.mrb[0].mxu0
        %v770 = vpop.f32.mrb[0].mxu0
        %v771 = vadd.f32 %v587, %v770
        %v772 = vpop.f32.mrb[0].mxu0
        %773 = vmatprep.mubr.bf16.mxu0 %v545
        %774 = vmatmul.mubr.bf16.gmra.mrb[0].mxu0 %v544
        %v775 = vpop.f32.mrb[0].mxu0
        %v776 = vadd.f32 %v587, %v775
        %v777 = vpop.f32.mrb[0].mxu0
        %v778 = vpop.f32.mrb[0].mxu0
        %v779 = vadd.f32 %v587, %v778
        %v780 = vpop.f32.mrb[0].mxu0
        %781 = vmatprep.mubr.bf16.mxu0 %v547
        %782 = vmatmul.mubr.bf16.gmra.mrb[0].mxu0 %v546
        %v783 = vpop.f32.mrb[0].mxu0
        %v784 = vadd.f32 %v587, %v783
        %v785 = vpop.f32.mrb[0].mxu0
        %v786 = vpop.f32.mrb[0].mxu0
        %v787 = vadd.f32 %v587, %v786
        %v788 = vpop.f32.mrb[0].mxu0
        %789 = vmatprep.mubr.bf16.mxu0 %v549
        %790 = vmatmul.mubr.bf16.gmra.mrb[0].mxu0 %v548
        %v791 = vpop.f32.mrb[0].mxu0
        %v792 = vadd.f32 %v587, %v791
        %v793 = vpop.f32.mrb[0].mxu0
        %v794 = vpop.f32.mrb[0].mxu0
        %v795 = vpop.f32.mrb[0].mxu0
        %796 = vdwg.mxu0
        %v797 = vlaneseq
        %v798 = vand.u32 %v797, 127
        %vm799 = vcmp.ge.s32.totalorder %v798, 4
        %vm800 = vcmp.lt.s32.totalorder %v798, 10
        %vm801 = vmand %vm799, %vm800
        %v802 = vsel %vm801, 1, 0
        %vm803 = vcmp.eq.s32.totalorder %v802, 1
        %v804 = vsel %vm803, %v720, -inf
        %v805 = vsel %vm803, %v723, -inf
        %v806 = vsel %vm803, %v728, -inf
        %v807 = vsel %vm803, %v731, -inf
        %v808 = vsel %vm803, %v736, -inf
        %v809 = vsel %vm803, %v739, -inf
        %v810 = vsel %vm803, %v744, -inf
        %v811 = vsel %vm803, %v747, -inf
        %v812 = vsel %vm803, %v752, -inf
        %v813 = vsel %vm803, %v755, -inf
        %v814 = vsel %vm803, %v760, -inf
        %v815 = vsel %vm803, %v763, -inf
        %v816 = vsel %vm803, %v768, -inf
        %v817 = vsel %vm803, %v771, -inf
        %v818 = vsel %vm803, %v776, -inf
        %v819 = vsel %vm803, %v779, -inf
        %v820 = vsel %vm803, %v784, -inf
        %v821 = vsel %vm803, %v787, -inf
        %v822 = vsel %vm803, %v792, -inf
        %823 = vmax.xlane.f32.xlu0 %v804
        %v824 = vpop.xlane.xlu0 %823
        %825 = vmax.xlane.f32.xlu0 %v805
        %v826 = vpop.xlane.xlu0 %825
        %827 = vmax.xlane.f32.xlu0 %v806
        %v828 = vpop.xlane.xlu0 %827
        %829 = vmax.xlane.f32.xlu0 %v807
        %v830 = vpop.xlane.xlu0 %829
        %831 = vmax.xlane.f32.xlu0 %v808
        %v832 = vpop.xlane.xlu0 %831
        %833 = vmax.xlane.f32.xlu0 %v809
        %v834 = vpop.xlane.xlu0 %833
        %835 = vmax.xlane.f32.xlu0 %v810
        %v836 = vpop.xlane.xlu0 %835
        %837 = vmax.xlane.f32.xlu0 %v811
        %v838 = vpop.xlane.xlu0 %837
        %839 = vmax.xlane.f32.xlu0 %v812
        %v840 = vpop.xlane.xlu0 %839
        %841 = vmax.xlane.f32.xlu0 %v813
        %v842 = vpop.xlane.xlu0 %841
        %843 = vmax.xlane.f32.xlu0 %v814
        %v844 = vpop.xlane.xlu0 %843
        %845 = vmax.xlane.f32.xlu0 %v815
        %v846 = vpop.xlane.xlu0 %845
        %847 = vmax.xlane.f32.xlu0 %v816
        %v848 = vpop.xlane.xlu0 %847
        %849 = vmax.xlane.f32.xlu0 %v817
        %v850 = vpop.xlane.xlu0 %849
        %851 = vmax.xlane.f32.xlu0 %v818
        %v852 = vpop.xlane.xlu0 %851
        %853 = vmax.xlane.f32.xlu0 %v819
        %v854 = vpop.xlane.xlu0 %853
        %855 = vmax.xlane.f32.xlu0 %v820
        %v856 = vpop.xlane.xlu0 %855
        %857 = vmax.xlane.f32.xlu0 %v821
        %v858 = vpop.xlane.xlu0 %857
        %859 = vmax.xlane.f32.xlu0 %v822
        %v860 = vpop.xlane.xlu0 %859
        %v861 = vsub.f32 %v804, %v824
        %v862 = vsub.f32 %v805, %v826
        %v863 = vsub.f32 %v806, %v828
        %v864 = vsub.f32 %v807, %v830
        %v865 = vsub.f32 %v808, %v832
        %v866 = vsub.f32 %v809, %v834
        %v867 = vsub.f32 %v810, %v836
        %v868 = vsub.f32 %v811, %v838
        %v869 = vsub.f32 %v812, %v840
        %v870 = vsub.f32 %v813, %v842
        %v871 = vsub.f32 %v814, %v844
        %v872 = vsub.f32 %v815, %v846
        %v873 = vsub.f32 %v816, %v848
        %v874 = vsub.f32 %v817, %v850
        %v875 = vsub.f32 %v818, %v852
        %v876 = vsub.f32 %v819, %v854
        %v877 = vsub.f32 %v820, %v856
        %v878 = vsub.f32 %v821, %v858
        %v879 = vsub.f32 %v822, %v860
        %v880 = vmul.f32 %v861, 1.442695
        %v881 = vpow.pop %v880
        %v882 = vmul.f32 %v862, 1.442695
        %v883 = vpow.pop %v882
        %v884 = vmul.f32 %v863, 1.442695
        %v885 = vpow.pop %v884
        %v886 = vmul.f32 %v864, 1.442695
        %v887 = vpow.pop %v886
        %v888 = vmul.f32 %v865, 1.442695
        %v889 = vpow.pop %v888
        %v890 = vmul.f32 %v866, 1.442695
        %v891 = vpow.pop %v890
        %v892 = vmul.f32 %v867, 1.442695
        %v893 = vpow.pop %v892
        %v894 = vmul.f32 %v868, 1.442695
        %v895 = vpow.pop %v894
        %v896 = vmul.f32 %v869, 1.442695
        %v897 = vpow.pop %v896
        %v898 = vmul.f32 %v870, 1.442695
        %v899 = vpow.pop %v898
        %v900 = vmul.f32 %v871, 1.442695
        %v901 = vpow.pop %v900
        %v902 = vmul.f32 %v872, 1.442695
        %v903 = vpow.pop %v902
        %v904 = vmul.f32 %v873, 1.442695
        %v905 = vpow.pop %v904
        %v906 = vmul.f32 %v874, 1.442695
        %v907 = vpow.pop %v906
        %v908 = vmul.f32 %v875, 1.442695
        %v909 = vpow.pop %v908
        %v910 = vmul.f32 %v876, 1.442695
        %v911 = vpow.pop %v910
        %v912 = vmul.f32 %v877, 1.442695
        %v913 = vpow.pop %v912
        %v914 = vmul.f32 %v878, 1.442695
        %v915 = vpow.pop %v914
        %v916 = vmul.f32 %v879, 1.442695
        %v917 = vpow.pop %v916
        %918 = vadd.xlane.f32.xlu0 %v881
        %v919 = vpop.xlane.xlu0 %918
        %920 = vadd.xlane.f32.xlu0 %v883
        %v921 = vpop.xlane.xlu0 %920
        %922 = vadd.xlane.f32.xlu0 %v885
        %v923 = vpop.xlane.xlu0 %922
        %924 = vadd.xlane.f32.xlu0 %v887
        %v925 = vpop.xlane.xlu0 %924
        %926 = vadd.xlane.f32.xlu0 %v889
        %v927 = vpop.xlane.xlu0 %926
        %928 = vadd.xlane.f32.xlu0 %v891
        %v929 = vpop.xlane.xlu0 %928
        %930 = vadd.xlane.f32.xlu0 %v893
        %v931 = vpop.xlane.xlu0 %930
        %932 = vadd.xlane.f32.xlu0 %v895
        %v933 = vpop.xlane.xlu0 %932
        %934 = vadd.xlane.f32.xlu0 %v897
        %v935 = vpop.xlane.xlu0 %934
        %936 = vadd.xlane.f32.xlu0 %v899
        %v937 = vpop.xlane.xlu0 %936
        %938 = vadd.xlane.f32.xlu0 %v901
        %v939 = vpop.xlane.xlu0 %938
        %940 = vadd.xlane.f32.xlu0 %v903
        %v941 = vpop.xlane.xlu0 %940
        %942 = vadd.xlane.f32.xlu0 %v905
        %v943 = vpop.xlane.xlu0 %942
        %944 = vadd.xlane.f32.xlu0 %v907
        %v945 = vpop.xlane.xlu0 %944
        %946 = vadd.xlane.f32.xlu0 %v909
        %v947 = vpop.xlane.xlu0 %946
        %948 = vadd.xlane.f32.xlu0 %v911
        %v949 = vpop.xlane.xlu0 %948
        %950 = vadd.xlane.f32.xlu0 %v913
        %v951 = vpop.xlane.xlu0 %950
        %952 = vadd.xlane.f32.xlu0 %v915
        %v953 = vpop.xlane.xlu0 %952
        %954 = vadd.xlane.f32.xlu0 %v917
        %v955 = vpop.xlane.xlu0 %954
        %v956 = vlog2.pop %v919
        %v957 = vmul.f32 %v956, 0.6931472
        %v958 = vlog2.pop %v921
        %v959 = vmul.f32 %v958, 0.6931472
        %v960 = vlog2.pop %v923
        %v961 = vmul.f32 %v960, 0.6931472
        %v962 = vlog2.pop %v925
        %v963 = vmul.f32 %v962, 0.6931472
        %v964 = vlog2.pop %v927
        %v965 = vmul.f32 %v964, 0.6931472
        %v966 = vlog2.pop %v929
        %v967 = vmul.f32 %v966, 0.6931472
        %v968 = vlog2.pop %v931
        %v969 = vmul.f32 %v968, 0.6931472
        %v970 = vlog2.pop %v933
        %v971 = vmul.f32 %v970, 0.6931472
        %v972 = vlog2.pop %v935
        %v973 = vmul.f32 %v972, 0.6931472
        %v974 = vlog2.pop %v937
        %v975 = vmul.f32 %v974, 0.6931472
        %v976 = vlog2.pop %v939
        %v977 = vmul.f32 %v976, 0.6931472
        %v978 = vlog2.pop %v941
        %v979 = vmul.f32 %v978, 0.6931472
        %v980 = vlog2.pop %v943
        %v981 = vmul.f32 %v980, 0.6931472
        %v982 = vlog2.pop %v945
        %v983 = vmul.f32 %v982, 0.6931472
        %v984 = vlog2.pop %v947
        %v985 = vmul.f32 %v984, 0.6931472
        %v986 = vlog2.pop %v949
        %v987 = vmul.f32 %v986, 0.6931472
        %v988 = vlog2.pop %v951
        %v989 = vmul.f32 %v988, 0.6931472
        %v990 = vlog2.pop %v953
        %v991 = vmul.f32 %v990, 0.6931472
        %v992 = vlog2.pop %v955
        %v993 = vmul.f32 %v992, 0.6931472
        %v994 = vadd.f32 %v957, %v824
        %v995 = vadd.f32 %v959, %v826
        %v996 = vadd.f32 %v961, %v828
        %v997 = vadd.f32 %v963, %v830
        %v998 = vadd.f32 %v965, %v832
        %v999 = vadd.f32 %v967, %v834
        %v1000 = vadd.f32 %v969, %v836
        %v1001 = vadd.f32 %v971, %v838
        %v1002 = vadd.f32 %v973, %v840
        %v1003 = vadd.f32 %v975, %v842
        %v1004 = vadd.f32 %v977, %v844
        %v1005 = vadd.f32 %v979, %v846
        %v1006 = vadd.f32 %v981, %v848
        %v1007 = vadd.f32 %v983, %v850
        %v1008 = vadd.f32 %v985, %v852
        %v1009 = vadd.f32 %v987, %v854
        %v1010 = vadd.f32 %v989, %v856
        %v1011 = vadd.f32 %v991, %v858
        %v1012 = vadd.f32 %v993, %v860
        %v1013 = vsub.f32 %v720, %v994
        %v1014 = vsub.f32 %v723, %v995
        %v1015 = vsub.f32 %v728, %v996
        %v1016 = vsub.f32 %v731, %v997
        %v1017 = vsub.f32 %v736, %v998
        %v1018 = vsub.f32 %v739, %v999
        %v1019 = vsub.f32 %v744, %v1000
        %v1020 = vsub.f32 %v747, %v1001
        %v1021 = vsub.f32 %v752, %v1002
        %v1022 = vsub.f32 %v755, %v1003
        %v1023 = vsub.f32 %v760, %v1004
        %v1024 = vsub.f32 %v763, %v1005
        %v1025 = vsub.f32 %v768, %v1006
        %v1026 = vsub.f32 %v771, %v1007
        %v1027 = vsub.f32 %v776, %v1008
        %v1028 = vsub.f32 %v779, %v1009
        %v1029 = vsub.f32 %v784, %v1010
        %v1030 = vsub.f32 %v787, %v1011
        %v1031 = vsub.f32 %v792, %v1012
        %v1032 = vsel %vm803, %v1013, %v720
        %v1033 = vsel %vm803, %v1014, %v723
        %v1034 = vsel %vm803, %v1015, %v728
        %v1035 = vsel %vm803, %v1016, %v731
        %v1036 = vsel %vm803, %v1017, %v736
        %v1037 = vsel %vm803, %v1018, %v739
        %v1038 = vsel %vm803, %v1019, %v744
        %v1039 = vsel %vm803, %v1020, %v747
        %v1040 = vsel %vm803, %v1021, %v752
        %v1041 = vsel %vm803, %v1022, %v755
        %v1042 = vsel %vm803, %v1023, %v760
        %v1043 = vsel %vm803, %v1024, %v763
        %v1044 = vsel %vm803, %v1025, %v768
        %v1045 = vsel %vm803, %v1026, %v771
        %v1046 = vsel %vm803, %v1027, %v776
        %v1047 = vsel %vm803, %v1028, %v779
        %v1048 = vsel %vm803, %v1029, %v784
        %v1049 = vsel %vm803, %v1030, %v787
        %v1050 = vsel %vm803, %v1031, %v792
        %v1051 = vpack.c.bf16 %v1033, %v1032
        %v1052 = vpack.c.bf16 %v1035, %v1034
        %v1053 = vpack.c.bf16 %v1037, %v1036
        %v1054 = vpack.c.bf16 %v1039, %v1038
        %v1055 = vpack.c.bf16 %v1041, %v1040
        %v1056 = vpack.c.bf16 %v1043, %v1042
        %v1057 = vpack.c.bf16 %v1045, %v1044
        %v1058 = vpack.c.bf16 %v1047, %v1046
        %v1059 = vpack.c.bf16 %v1049, %v1048
        %v1060 = vpack.c.bf16 %v1050, %v1050
        %v1071 = vunpack.c.l.b16 %v1051
        %v1072 = vunpack.c.h.b16 %v1051
        %v1073 = vunpack.c.l.b16 %v1052
        %v1074 = vunpack.c.h.b16 %v1052
        %v1075 = vunpack.c.l.b16 %v1053
        %v1076 = vunpack.c.h.b16 %v1053
        %v1077 = vunpack.c.l.b16 %v1054
        %v1078 = vunpack.c.h.b16 %v1054
        %v1079 = vunpack.c.l.b16 %v1055
        %v1080 = vunpack.c.h.b16 %v1055
        %v1081 = vunpack.c.l.b16 %v1056
        %v1082 = vunpack.c.h.b16 %v1056
        %v1083 = vunpack.c.l.b16 %v1057
        %v1084 = vunpack.c.h.b16 %v1057
        %v1085 = vunpack.c.l.b16 %v1058
        %v1086 = vunpack.c.h.b16 %v1058
        %v1087 = vunpack.c.l.b16 %v1059
        %v1088 = vunpack.c.h.b16 %v1059
        %v1089 = vunpack.c.l.b16 %v1060
        %v1090 = vpack.c.b16 %v1071, %v1071
        %v1091 = vpack.c.b16 %v1072, %v1072
        %v1092 = vpack.c.b16 %v1073, %v1073
        %v1093 = vpack.c.b16 %v1074, %v1074
        %v1094 = vpack.c.b16 %v1075, %v1075
        %v1095 = vpack.c.b16 %v1076, %v1076
        %v1096 = vpack.c.b16 %v1077, %v1077
        %v1097 = vpack.c.b16 %v1078, %v1078
        %v1098 = vpack.c.b16 %v1079, %v1079
        %v1099 = vpack.c.b16 %v1080, %v1080
        %v1100 = vpack.c.b16 %v1081, %v1081
        %v1101 = vpack.c.b16 %v1082, %v1082
        %v1102 = vpack.c.b16 %v1083, %v1083
        %v1103 = vpack.c.b16 %v1084, %v1084
        %v1104 = vpack.c.b16 %v1085, %v1085
        %v1105 = vpack.c.b16 %v1086, %v1086
        %v1106 = vpack.c.b16 %v1087, %v1087
        %v1107 = vpack.c.b16 %v1088, %v1088
        %v1108 = vpack.c.b16 %v1089, %v1089
        %1128 = vst [vmem:[%s218] sm:$0xf] %v1090
        %1129 = vst [vmem:[%s218 + $0x4] sm:$0xf] %v1091
        %1130 = vst [vmem:[%s218 + $0x8] sm:$0xf] %v1092
        %1131 = vst [vmem:[%s218 + $0xc] sm:$0xf] %v1093
        %1132 = vst [vmem:[%s218 + $0x10] sm:$0xf] %v1094
        %1133 = vst [vmem:[%s218 + $0x14] sm:$0xf] %v1095
        %1134 = vst [vmem:[%s218 + $0x18] sm:$0xf] %v1096
        %1135 = vst [vmem:[%s218 + $0x1c] sm:$0xf] %v1097
        %1136 = vst [vmem:[%s218 + $0x20] sm:$0xf] %v1098
        %1137 = vst [vmem:[%s218 + $0x24] sm:$0xf] %v1099
        %1138 = vst [vmem:[%s218 + $0x28] sm:$0xf] %v1100
        %1139 = vst [vmem:[%s218 + $0x2c] sm:$0xf] %v1101
        %1140 = vst [vmem:[%s218 + $0x30] sm:$0xf] %v1102
        %1141 = vst [vmem:[%s218 + $0x34] sm:$0xf] %v1103
        %1142 = vst [vmem:[%s218 + $0x38] sm:$0xf] %v1104
        %1143 = vst [vmem:[%s218 + $0x3c] sm:$0xf] %v1105
        %1144 = vst [vmem:[%s218 + $0x40] sm:$0xf] %v1106
        %1145 = vst [vmem:[%s218 + $0x44] sm:$0xf] %v1107
        %1146 = vst [vmem:[%s218 + $0x48] sm:$0xf] %v1108
        %s1147 = sand.u32 %s137, 1
        %s1148 = scalar_lea.sflag [#allocation3], %s1147
        %s1149 = sand.u32 %s137, 1
        %s1150 = smul.addr %s1149, 76
        %s1151 = scalar_lea.vmem [#allocation2], %s1150
        // Predicated region
        $region41: #{tpu_custom_call.1} parent=39 // pred_check
          %p1152 = pneg %p147
        $region42: #{tpu_custom_call.1} parent=39 // pred_check_branch
          %1154 = sbr.rel (%p1152) target = $region44
        $region43: #{tpu_custom_call.1} parent=39 // pred_region
          %s1155 = smul.u32 19, %s19
          %s1157 = ssub.s32 1216, 1216
          %1158 = vsyncadd %s1148, %s1157
          %s1159 = smul.addr %s1155, 64
          %s1160 = scalar_lea.hbm %s5, %s1159
          %s1161 = sshll.u32 %s1151, 4
          %s1162 = int_to_ptr.vmem [resolvable:$true] %s1161
          %1167 = dma.vmem_to_hbm [thread:$0]  %s1162, 1216, %s1160, %s1148, 64, 64, 4
        $region44: #{tpu_custom_call.1} parent=39 // pred_fallthru
          _
      $region40: #{tpu_custom_call.1} parent=5 // pred_fallthru
        _
      %p1168 = scmp.le.s32.totalorder 2, %s14
      // Predicated region
      $region45: #{tpu_custom_call.1} parent=5 // pred_check
        %p1169 = pneg %p1168
      $region46: #{tpu_custom_call.1} parent=5 // pred_check_branch
        %1171 = sbr.rel (%p1169) target = $region48
      $region47: #{tpu_custom_call.1} parent=5 // pred_region
        %s1172 = ssub.s32 %s14, 2
        // Predicated region
        $region49: #{tpu_custom_call.1} parent=47 // pred_check
          %p1173 = pneg %p153
        $region50: #{tpu_custom_call.1} parent=47 // pred_check_branch
          %1175 = sbr.rel (%p1173) target = $region52
        $region51: #{tpu_custom_call.1} parent=47 // pred_region
          %s1176 = sand.u32 %s138, 1
          %s1177 = scalar_lea.sflag [#allocation3], %s1176
          %s1178 = sand.u32 %s138, 1
          %s1179 = smul.addr %s1178, 76
          %s1180 = scalar_lea.vmem [#allocation2], %s1179
          %1181 = dma.done %s1177, 1216
        $region52: #{tpu_custom_call.1} parent=47 // pred_fallthru
          _
      $region48: #{tpu_custom_call.1} parent=5 // pred_fallthru
        _
    $region6: #{tpu_custom_call.1} parent=1 // loop_footer
      %s18 = sadd.s32 1, %s14
    $region7: #{tpu_custom_call.1} parent=1 // loop_footer_branch
      %13 = sbr.rel target = $region3
    $region8: #{tpu_custom_call.1} parent=1 // loop_exit
      _
    %1182 = vsyncpa [#allocation3], 1
    %s1183 = scalar_lea.sflag [#allocation3], 1
    %1184 = vsyncpa %s1183, 1

</llo_original>
